<compile_context>
chip_gen: v6e
topology: v6e:2x2x1
jax: 0.10.0
libtpu: 0.0.40
codegen_flags: <defaults>
</compile_context>

<pallas_src>
import functools

import jax
import jax.numpy as jnp
from jax.experimental import pallas as pl
from jax.experimental.pallas import tpu as pltpu


def _round_up(x, m):
    return ((x + m - 1) // m) * m


def _sublane(itemsize):
    # Minimum second-minor tile rows: 8 for 4-byte, 16 for 2-byte, 32 for 1-byte.
    return max(8, 32 // max(1, itemsize))


# ---------------------------------------------------------------------------
# In-kernel Gaussian noise from the TPU hardware PRNG (TPU backend only).
# ---------------------------------------------------------------------------
def _uniform_from_bits(bits):
    """Raw PRNG bits -> f32 uniform in [0, 1) via the mantissa trick."""
    bits = pltpu.bitcast(bits, jnp.uint32)
    mantissa = bits & jnp.uint32(0x7FFFFF)          # low 23 bits
    fbits = mantissa | jnp.uint32(0x3F800000)       # exponent of 1.0 -> [1, 2)
    return pltpu.bitcast(fbits, jnp.float32) - 1.0


def _scaled_normal(shape, scale):
    """scale * N(0,1) of `shape`, Box-Muller using both outputs when possible."""
    two_pi = 6.283185307179586
    if shape[0] % 2 == 0:
        half = (shape[0] // 2, shape[1])
        u1 = 1.0 - _uniform_from_bits(pltpu.prng_random_bits(half))   # (0, 1]
        u2 = _uniform_from_bits(pltpu.prng_random_bits(half))         # [0, 1)
        # epsilon folded into the radius: one fewer VALU multiply per element.
        r = jnp.sqrt((-2.0 * scale * scale) * jnp.log(u1))
        theta = two_pi * u2
        return jnp.concatenate([r * jnp.cos(theta), r * jnp.sin(theta)], axis=0)
    # Odd tile height (only when tile_b == B and B is odd): plain Box-Muller.
    u1 = 1.0 - _uniform_from_bits(pltpu.prng_random_bits(shape))
    u2 = _uniform_from_bits(pltpu.prng_random_bits(shape))
    r = jnp.sqrt((-2.0 * scale * scale) * jnp.log(u1))
    return r * jnp.cos(two_pi * u2)


# ---------------------------------------------------------------------------
# Kernels
# ---------------------------------------------------------------------------
def _kernel_hw_noise(seed_ref, x_ref, p_ref, o_ref, *, epsilon):
    xt = jnp.dot(x_ref[...], p_ref[...], preferred_element_type=jnp.float32)
    # Per-block stream, folded into a single scalar seed.
    pltpu.prng_seed(seed_ref[0] + pl.program_id(0) * 7919)
    xt = xt + _scaled_normal(xt.shape, epsilon)
    o_ref[...] = xt.astype(o_ref.dtype)


def _kernel_streamed_noise(x_ref, p_ref, noise_ref, o_ref, *, epsilon):
    xt = jnp.dot(x_ref[...], p_ref[...], preferred_element_type=jnp.float32)
    xt = xt + jnp.float32(epsilon) * noise_ref[...].astype(jnp.float32)
    o_ref[...] = xt.astype(o_ref.dtype)


def _kernel_no_noise(x_ref, p_ref, o_ref):
    xt = jnp.dot(x_ref[...], p_ref[...], preferred_element_type=jnp.float32)
    o_ref[...] = xt.astype(o_ref.dtype)


# ---------------------------------------------------------------------------
# Wrapper
# ---------------------------------------------------------------------------
def _p_block_spec(F, index_map):
    """Resident P block; single-buffered when the installed jax supports it."""
    try:
        return pl.BlockSpec((F, F), index_map, pipeline_mode=pl.Buffered(1))
    except (AttributeError, TypeError):
        return pl.BlockSpec((F, F), index_map)


def _default_tile_b(B, F, itemsize, n_streamed_inputs):
    sub = _sublane(itemsize)
    if B <= sub:
        return B
    # Double-buffered x / out (+ noise) tiles plus ~24 B/elem of in-kernel f32
    # temporaries; ~6 MiB budget stays safe under v5e's 16 MiB default limit.
    bytes_per_row = (4 + 2 * n_streamed_inputs) * F * itemsize + 24 * F
    t = max(sub, min(2048, (6 * 1024 * 1024) // bytes_per_row))
    # >= 2 blocks (keeps the DMA pipeline busy); prefer an even block count
    # (v7x shards the "parallel" axis across its 2 TensorCores).
    nblocks = max(2, pl.cdiv(B, t))
    if nblocks % 2:
        nblocks += 1
    t = _round_up(pl.cdiv(B, nblocks), sub)
    if t >= 256:
        t = (t // 256) * 256        # full MXU-pass height on v6e/v7x
    return max(sub, min(t, _round_up(B, sub)))


def _xla_path(x, P, seed, epsilon):
    out = jnp.dot(x, P, preferred_element_type=jnp.float32)
    if epsilon != 0.0:
        noise = jax.random.normal(jax.random.PRNGKey(seed), out.shape, jnp.float32)
        out = out + jnp.float32(epsilon) * noise
    return out.astype(x.dtype)


def feature_augmentation(x, P, *, seed=0, epsilon=0.01, tile_b=None,
                         force_pallas=False):
    """x: [B, F], P: [F, F]. Returns x @ P + epsilon * N(0, 1)."""
    B, F = x.shape
    assert P.shape == (F, F)
    epsilon = float(epsilon)

    # Tiny problems: pallas_call launch overhead dwarfs the work; let XLA fuse.
    if not force_pallas and B * F < (1 << 16):
        return _xla_path(x, P, seed, epsilon)

    on_tpu = jax.default_backend() == "tpu"
    use_hw_prng = on_tpu and epsilon != 0.0
    streamed = (epsilon != 0.0) and not use_hw_prng
    itemsize = jnp.dtype(x.dtype).itemsize

    if tile_b is None:
        tile_b = _default_tile_b(B, F, itemsize, 1 if streamed else 0)
    else:
        sub = _sublane(itemsize)
        tile_b = min(int(tile_b), B)
        if tile_b != B and tile_b % sub:
            tile_b = _round_up(tile_b, sub)

    grid = (pl.cdiv(B, tile_b),)

    # Resident-P VMEM feasibility; fall back to XLA rather than spill / fail.
    # TODO(synk): K-tile P with an f32 accumulator instead of this fallback.
    vmem_need = (itemsize * ((4 + (2 if streamed else 0)) * tile_b * F + F * F)
                 + 28 * tile_b * F)
    vmem_cap = 64 << 20                      # v7x physical per-TC (conservative)
    if on_tpu:
        try:
            vmem_cap = int(pltpu.get_tpu_info().vmem_capacity_bytes)
        except Exception:
            pass
    if vmem_need > int(0.75 * vmem_cap):
        return _xla_path(x, P, seed, epsilon)

    compiler_kwargs = dict(dimension_semantics=("parallel",))
    if vmem_need > (12 << 20):
        compiler_kwargs["vmem_limit_bytes"] = int(min(0.75 * vmem_cap,
                                                      2 * vmem_need))

    out_shape = jax.ShapeDtypeStruct((B, F), x.dtype)

    if use_hw_prng:
        kernel = functools.partial(_kernel_hw_noise, epsilon=epsilon)
        grid_spec = pltpu.PrefetchScalarGridSpec(
            num_scalar_prefetch=1,
            grid=grid,
            in_specs=[
                pl.BlockSpec((tile_b, F), lambda i, seed_ref: (i, 0)),  # x tile
                _p_block_spec(F, lambda i, seed_ref: (0, 0)),           # P resident
            ],
            out_specs=pl.BlockSpec((tile_b, F), lambda i, seed_ref: (i, 0)),
        )
        args = (jnp.asarray([seed], dtype=jnp.int32), x, P)
    elif streamed:
        noise = jax.random.normal(jax.random.PRNGKey(seed), (B, F), jnp.float32)
        kernel = functools.partial(_kernel_streamed_noise, epsilon=epsilon)
        grid_spec = pltpu.PrefetchScalarGridSpec(
            num_scalar_prefetch=0,
            grid=grid,
            in_specs=[
                pl.BlockSpec((tile_b, F), lambda i: (i, 0)),            # x tile
                _p_block_spec(F, lambda i: (0, 0)),                     # P resident
                pl.BlockSpec((tile_b, F), lambda i: (i, 0)),            # noise tile
            ],
            out_specs=pl.BlockSpec((tile_b, F), lambda i: (i, 0)),
        )
        args = (x, P, noise)
    else:
        kernel = _kernel_no_noise
        grid_spec = pltpu.PrefetchScalarGridSpec(
            num_scalar_prefetch=0,
            grid=grid,
            in_specs=[
                pl.BlockSpec((tile_b, F), lambda i: (i, 0)),
                _p_block_spec(F, lambda i: (0, 0)),
            ],
            out_specs=pl.BlockSpec((tile_b, F), lambda i: (i, 0)),
        )
        args = (x, P)

    return pl.pallas_call(
        kernel,
        out_shape=out_shape,
        grid_spec=grid_spec,
        compiler_params=pltpu.CompilerParams(**compiler_kwargs),
    )(*args)


if __name__ == "__main__":
    key = jax.random.PRNGKey(0)
    k_x, k_p = jax.random.split(key, 2)

    batch_size = 8
    num_features = 32
    epsilon = 0.01

    # Deterministic stand-in for nn.Parameter(torch.randn(F, F)).
    P = jax.random.normal(k_p, (num_features, num_features), dtype=jnp.float32)
    x = jax.random.normal(k_x, (batch_size, num_features), dtype=jnp.float32)

    ref = x @ P

    # (1) epsilon = 0 path: validates the (lane-unpadded) matmul exactly.
    out_det = feature_augmentation(x, P, seed=0, epsilon=0.0, force_pallas=True)
    out_det = jax.block_until_ready(out_det)
    assert out_det.shape == (batch_size, num_features)
    assert jnp.allclose(out_det, ref, atol=1e-4, rtol=1e-5)

    # (2) epsilon > 0 path: noise checked statistically (cannot bit-match
    #     torch.randn_like regardless of backend).
    out = feature_augmentation(x, P, seed=0, epsilon=epsilon, force_pallas=True)
    out = jax.block_until_ready(out)
    assert out.shape == (batch_size, num_features)
    diff = out - ref
    assert not bool(jnp.any(jnp.isnan(out)))
    assert float(jnp.max(jnp.abs(diff))) < 8.0 * epsilon
    assert 0.2 * epsilon < float(jnp.std(diff)) < 3.0 * epsilon

    print("KERNEL_OK")
</pallas_src>

<mosaic_0001>
module attributes {stable_mosaic.version = 11 : i64} {
  func.func @_kernel_no_noise(%arg0: i32, %arg1: memref<8x32xf32, #tpu.memory_space<vmem>>, %arg2: memref<32x32xf32, #tpu.memory_space<vmem>>, %arg3: memref<8x32xf32, #tpu.memory_space<vmem>>) attributes {dimension_semantics = [#tpu.dimension_semantics<parallel>], iteration_bounds = array<i64: 1>, scalar_prefetch = 0 : i64, scratch_operands = 0 : i64, tpu.core_type = #tpu.core_type<tc>, window_params = [{transform_indices = @transform_0, window_bounds = array<i64: 8, 32>}, {pipeline_mode = #tpu.pipeline_mode<synchronous>, transform_indices = @transform_1, window_bounds = array<i64: 32, 32>}, {transform_indices = @transform_2, window_bounds = array<i64: 8, 32>}]} {
    %c0 = arith.constant 0 : index
    %c0_0 = arith.constant 0 : index
    %0 = vector.load %arg1[%c0, %c0_0] : memref<8x32xf32, #tpu.memory_space<vmem>>, vector<8x32xf32>
    %c0_1 = arith.constant 0 : index
    %c0_2 = arith.constant 0 : index
    %1 = vector.load %arg2[%c0_1, %c0_2] : memref<32x32xf32, #tpu.memory_space<vmem>>, vector<32x32xf32>
    %cst = arith.constant dense<0.000000e+00> : vector<8x32xf32>
    %2 = tpu.matmul %0, %1, %cst {dimension_numbers = #tpu.dot_dimension_numbers<[1], [0], [0], [1], [0, 0, 1, 1], [], []>} : vector<8x32xf32>, vector<32x32xf32>, vector<8x32xf32> -> vector<8x32xf32>
    %c0_3 = arith.constant 0 : index
    %c0_4 = arith.constant 0 : index
    %3 = vector.load %arg3[%c0_3, %c0_4] : memref<8x32xf32, #tpu.memory_space<vmem>>, vector<8x32xf32>
    tpu.vector_store %arg3[%c0_3, %c0_4], %2 {strides = array<i32>} : memref<8x32xf32, #tpu.memory_space<vmem>>, vector<8x32xf32>,
    return
  }
  func.func @transform_0(%arg0: i32) -> (i32, i32) {
    %c0_i32 = arith.constant 0 : i32
    %c0_i32_0 = arith.constant 0 : i32
    return %arg0, %c0_i32 : i32, i32
  }
  func.func @transform_1(%arg0: i32) -> (i32, i32) {
    %c0_i32 = arith.constant 0 : i32
    %c0_i32_0 = arith.constant 0 : i32
    %c0_i32_1 = arith.constant 0 : i32
    return %c0_i32, %c0_i32_0 : i32, i32
  }
  func.func @transform_2(%arg0: i32) -> (i32, i32) {
    %c0_i32 = arith.constant 0 : i32
    %c0_i32_0 = arith.constant 0 : i32
    return %arg0, %c0_i32 : i32, i32
  }
}

</mosaic_0001>

<llo_original>
// kernel: tpu_custom_call.1
$region0: #{tpu_custom_call.1}
  #allocation0 [shape = 'u32[]', space=smem, size = 0x4, offset = 0x4, fixed_abs, tag = 'smem constant byte address 0x4 - core index']
  #allocation1 [shape = 'u32[144,128]{1,0:T(1,128)}', space=vmem, size = 0x12000, scoped, tag = 'internal scratch']
  %s0 = inlined_call_operand.hbm [shape: f32[8,32], index: 0, kind: input, shape index: {}]
  %s1 = inlined_call_operand.hbm [shape: f32[32,32], index: 1, kind: input, shape index: {}]
  %s2 = inlined_call_operand.hbm [shape: f32[8,32], index: 2, kind: output, shape index: {}]
  %s3 = sld [smem:[#allocation0]]
  $region26: #{tpu_custom_call.1} parent=0
    _
  %s5 = ssub.s32 1, %s3
  %s6 = scalar_select 0, %s5, %s3
  $region1: #{tpu_custom_call.1} parent=0
    #allocation2 [shape = 'u8[4096]{0}', space=vmem, size = 0x1000, scoped, tag = 'input window, operand 0, single buffered']
    #allocation3 [shape = 's32[1]{0}', space=sflag, size = 0x4, scoped, tag = 'scoped memory for tpu_custom_call.1']
    #allocation4 [shape = 's32[1]{0}', space=sflag, size = 0x4, scoped, tag = 'scoped memory for tpu_custom_call.1']
    #allocation5 [shape = 'u8[16384]{0}', space=vmem, size = 0x4000, scoped, tag = 'input window, operand 1, single buffered']
    #allocation6 [shape = 's32[1]{0}', space=sflag, size = 0x4, scoped, tag = 'scoped memory for tpu_custom_call.1']
    #allocation7 [shape = 'u8[4096]{0}', space=vmem, size = 0x1000, scoped, tag = 'output window, operand 0, single buffered']
    %7 = vsyncpa [#allocation3], 0
    %8 = vsyncpa [#allocation6], 0
    %9 = vsyncpa [#allocation4], 0
    // Predicated region
    $region2: #{tpu_custom_call.1} parent=1 // pred_check
      _
    $region3: #{tpu_custom_call.1} parent=1 // pred_check_branch
      %11 = sbr.rel (0) target = $region5
    $region4: #{tpu_custom_call.1} parent=1 // pred_region
      %s13 = ssub.s32 128, 128
      %14 = vsyncadd [#allocation3], %s13
      %s16 = sshll.u32 [#allocation2], 4
      %s17 = int_to_ptr.vmem [resolvable:$true] %s16
      %19 = dma.hbm_to_vmem [thread:$0]  %s0, 128, %s17, [#allocation3]
    $region5: #{tpu_custom_call.1} parent=1 // pred_fallthru
      _
    // Predicated region
    $region6: #{tpu_custom_call.1} parent=1 // pred_check
      _
    $region7: #{tpu_custom_call.1} parent=1 // pred_check_branch
      %21 = sbr.rel (0) target = $region9
    $region8: #{tpu_custom_call.1} parent=1 // pred_region
      %s23 = ssub.s32 512, 512
      %24 = vsyncadd [#allocation6], %s23
      %s25 = sshll.u32 [#allocation5], 4
      %s26 = int_to_ptr.vmem [resolvable:$true] %s25
      %31 = dma.hbm_to_vmem [thread:$0]  %s1, 512, %s26, [#allocation6], 128, 128, 8
    $region9: #{tpu_custom_call.1} parent=1 // pred_fallthru
      _
    // Predicated region
    $region10: #{tpu_custom_call.1} parent=1 // pred_check
      _
    $region11: #{tpu_custom_call.1} parent=1 // pred_check_branch
      %33 = sbr.rel (0) target = $region13
    $region12: #{tpu_custom_call.1} parent=1 // pred_region
      %34 = dma.done [#allocation3], 128
    $region13: #{tpu_custom_call.1} parent=1 // pred_fallthru
      _
    // Predicated region
    $region14: #{tpu_custom_call.1} parent=1 // pred_check
      _
    $region15: #{tpu_custom_call.1} parent=1 // pred_check_branch
      %36 = sbr.rel (0) target = $region17
    $region16: #{tpu_custom_call.1} parent=1 // pred_region
      %37 = dma.done [#allocation6], 512
    $region17: #{tpu_custom_call.1} parent=1 // pred_fallthru
      _
    %v38 = vld [vmem:[#allocation2] sm:$0xff]
    %v39 = vld [vmem:[#allocation5] sm:$0xff]
    %v40 = vld [vmem:[#allocation5 + $0x8] sm:$0xff]
    %v41 = vld [vmem:[#allocation5 + $0x10] sm:$0xff]
    %v42 = vld [vmem:[#allocation5 + $0x18] sm:$0xff]
    %vm43 = vcmask 261120
    %v45 = vsel %vm43, %v38, 0
    %47 = vmatprep.subr.mxu0 0.0
    %48 = vmatpush1.msra.mxu0 0.0
    %49 = vmatprep.subr.mxu0 0.0
    %50 = vmatpush1.msra.mxu0 0.0
    %51 = vmatprep.subr.mxu0 0.0
    %52 = vmatpush1.msra.mxu0 0.0
    %53 = vmatprep.subr.mxu0 0.0
    %54 = vmatpush1.msra.mxu0 0.0
    %55 = vmatprep.subr.mxu0 0.0
    %56 = vmatpush1.msra.mxu0 0.0
    %57 = vmatprep.subr.mxu0 0.0
    %58 = vmatpush1.msra.mxu0 0.0
    %59 = vmatprep.subr.mxu0 0.0
    %60 = vmatpush1.msra.mxu0 0.0
    %61 = vmatprep.subr.mxu0 0.0
    %62 = vmatpush1.msra.mxu0 0.0
    %63 = vmatprep.subr.mxu0 0.0
    %64 = vmatpush1.msra.mxu0 0.0
    %65 = vmatprep.subr.mxu0 0.0
    %66 = vmatpush1.msra.mxu0 0.0
    %67 = vmatprep.subr.mxu0 0.0
    %68 = vmatpush1.msra.mxu0 0.0
    %69 = vmatprep.subr.mxu0 0.0
    %70 = vmatpush1.msra.mxu0 0.0
    %71 = vmatprep.subr.mxu0 0.0
    %72 = vmatpush1.msra.mxu0 %v42
    %73 = vmatprep.subr.mxu0 0.0
    %74 = vmatpush1.msra.mxu0 %v41
    %75 = vmatprep.subr.mxu0 0.0
    %76 = vmatpush1.msra.mxu0 %v40
    %77 = vmatprep.subr.mxu0 0.0
    %78 = vmatpush1.msra.mxu0 %v39
    %79 = vmatprep.subr.mxu0 0.0
    %80 = vmatpush2.msra.mxu0 0.0
    %81 = vmatprep.subr.mxu0 0.0
    %82 = vmatpush2.msra.mxu0 0.0
    %83 = vmatprep.subr.mxu0 0.0
    %84 = vmatpush2.msra.mxu0 0.0
    %85 = vmatprep.subr.mxu0 0.0
    %86 = vmatpush2.msra.mxu0 0.0
    %87 = vmatprep.subr.mxu0 0.0
    %88 = vmatpush2.msra.mxu0 0.0
    %89 = vmatprep.subr.mxu0 0.0
    %90 = vmatpush2.msra.mxu0 0.0
    %91 = vmatprep.subr.mxu0 0.0
    %92 = vmatpush2.msra.mxu0 0.0
    %93 = vmatprep.subr.mxu0 0.0
    %94 = vmatpush2.msra.mxu0 0.0
    %95 = vmatprep.subr.mxu0 0.0
    %96 = vmatpush2.msra.mxu0 0.0
    %97 = vmatprep.subr.mxu0 0.0
    %98 = vmatpush2.msra.mxu0 0.0
    %99 = vmatprep.subr.mxu0 0.0
    %100 = vmatpush2.msra.mxu0 0.0
    %101 = vmatprep.subr.mxu0 0.0
    %102 = vmatpush2.msra.mxu0 0.0
    %103 = vmatprep.subr.mxu0 0.0
    %104 = vmatpush2.msra.mxu0 0.0
    %105 = vmatprep.subr.mxu0 0.0
    %106 = vmatpush2.msra.mxu0 0.0
    %107 = vmatprep.subr.mxu0 0.0
    %108 = vmatpush2.msra.mxu0 0.0
    %109 = vmatprep.subr.mxu0 0.0
    %110 = vmatpush2.msra.mxu0 0.0
    %111 = vmatprep.mubr.f32.mxu0 0.0
    %112 = vmatmul.mubr.f32.gmra.mxu0 %v45
    %v113 = vpop.f32.mrf.mxu0
    %v114 = vadd.f32 0.0, %v113
    %v115 = vpop.f32.mrf.mxu0
    %116 = vdwg.mxu0
    %117 = vst.msk [vmem:[#allocation7] sm:$0xff] %vm43, %v114
    // Predicated region
    $region18: #{tpu_custom_call.1} parent=1 // pred_check
      _
    $region19: #{tpu_custom_call.1} parent=1 // pred_check_branch
      %119 = sbr.rel (0) target = $region21
    $region20: #{tpu_custom_call.1} parent=1 // pred_region
      %s121 = ssub.s32 128, 128
      %122 = vsyncadd [#allocation4], %s121
      %s124 = sshll.u32 [#allocation7], 4
      %s125 = int_to_ptr.vmem [resolvable:$true] %s124
      %127 = dma.vmem_to_hbm [thread:$0]  %s125, 128, %s2, [#allocation4]
    $region21: #{tpu_custom_call.1} parent=1 // pred_fallthru
      _
    // Predicated region
    $region22: #{tpu_custom_call.1} parent=1 // pred_check
      _
    $region23: #{tpu_custom_call.1} parent=1 // pred_check_branch
      %129 = sbr.rel (0) target = $region25
    $region24: #{tpu_custom_call.1} parent=1 // pred_region
      %130 = dma.done [#allocation4], 128
    $region25: #{tpu_custom_call.1} parent=1 // pred_fallthru
      _
    %131 = vsyncpa [#allocation3], 1
    %132 = vsyncpa [#allocation6], 1
    %133 = vsyncpa [#allocation4], 1

</llo_original>
